<compile_context>
chip_gen: v7x
topology: tpu7x:2x2x1
jax: 0.10.0
libtpu: 0.0.40
codegen_flags: <defaults>
</compile_context>

<pallas_src>
import functools

import jax
import jax.numpy as jnp
from jax import lax
from jax.experimental import pallas as pl
from jax.experimental.pallas import tpu as pltpu


def _round_up(x, m):
    return ((x + m - 1) // m) * m


def _layer_norm(v, gamma, beta, eps=1e-5):
    mu = jnp.mean(v, axis=-1, keepdims=True)
    var = jnp.mean((v - mu) ** 2, axis=-1, keepdims=True)
    return (v - mu) * lax.rsqrt(var + eps) * gamma + beta


# ---------------------------------------------------------------------------
# Kernel
# ---------------------------------------------------------------------------
def _mixing_kernel(x_ref, slots_ref, wq_ref, wk_ref, *rest, scale, layer_norm):
    if layer_norm:
        g1_ref, b1_ref, g2_ref, b2_ref, s_ref, wt_ref = rest
    else:
        s_ref, wt_ref = rest

    # ---- fused slot-side matmuls (tiny; recomputed per step, no scratch) ----
    slots = slots_ref[0].astype(jnp.float32)                      # (S, Dslot)
    k = jnp.dot(slots, wk_ref[...].astype(jnp.float32),
                preferred_element_type=jnp.float32)               # (S, A)
    # M[d, s] = scale * sum_a wq[d, a] * k[s, a]
    m = lax.dot_general(wq_ref[...].astype(jnp.float32), k,
                        (((1,), (1,)), ((), ())),
                        preferred_element_type=jnp.float32)       # (Din, S)
    m = m * scale

    # ---- ray path: slots on sublanes, rays on lanes -------------------------
    x = x_ref[0].astype(jnp.float32)                              # (TR, Din)
    if layer_norm:
        x = _layer_norm(x, g1_ref[...], b1_ref[...])

    # dots_T[s, r] = sum_d m[d, s] * x[r, d]
    dots_t = lax.dot_general(m, x, (((0,), (1,)), ((), ())),
                             preferred_element_type=jnp.float32)  # (S, TR)

    mx = jnp.max(dots_t, axis=0, keepdims=True)                   # (1, TR)
    e = jnp.exp(dots_t - mx)                                      # (S, TR)
    l = jnp.sum(e, axis=0, keepdims=True)                         # (1, TR)
    inv = pl.reciprocal(l, approx=True)                           # EUP slot
    inv = inv * (2.0 - l * inv)                                   # Newton -> ~exact
    w_t = e * inv                                                 # (S, TR)

    # s[r, d] = sum_s w_t[s, r] * slots[s, d]
    s = lax.dot_general(w_t, slots, (((0,), (0,)), ((), ())),
                        preferred_element_type=jnp.float32)       # (TR, Dslot)
    if layer_norm:
        s = _layer_norm(s, g2_ref[...], b2_ref[...])

    s_ref[0] = s.astype(s_ref.dtype)
    wt_ref[0] = w_t.astype(wt_ref.dtype)       # (S, TR): lane-dense, no transpose


# ---------------------------------------------------------------------------
# Wrapper
# ---------------------------------------------------------------------------
def mixing_block(x, slot_latents, wq, wk, *, layer_norm=False, norm_params=None,
                 tile_r=2048, out_dtype=jnp.float32, return_w_transposed=False):
    """Pallas TPU implementation of MixingBlock.forward.

    Args:
      x            : [B, R, input_dim]   (f32 or bf16)
      slot_latents : [B, S, slot_dim]    (f32 or bf16)
      wq           : [input_dim, att_dim]  (to_q.weight, pre-transposed)
      wk           : [slot_dim, att_dim]   (to_k.weight, pre-transposed)
      layer_norm   : static flag (module's `layer_norm` ctor arg)
      norm_params  : (gamma1, beta1, gamma2, beta2) with feature-sized last dim
      tile_r       : ray tile (rounded to a multiple of 128; 2048-4096 amortizes
                     per-step overhead; clamped for small R)
      out_dtype    : dtype of s and w in HBM (f32 exact, bf16 halves writeback)
      return_w_transposed : if True, return w as [B, S, R] (lane-dense layout,
                     skips the wrapper-side transpose — preferred if consumers
                     can take it)
    Returns:
      (s, w): s = [B, R, slot_dim],
              w = [B, R, S]  (or [B, S, R] if return_w_transposed)
    """
    B, R, Din = x.shape
    _, S, Dslot = slot_latents.shape
    A = wq.shape[1]
    scale = float(A) ** (-0.5)

    # Ray tile: multiple of 128 so the transposed-w block is lane-dense and all
    # (8,128) divisibility constraints hold; clamp for small R.
    tile_r = max(128, _round_up(min(tile_r, _round_up(R, 128)), 128))
    r_pad = _round_up(R, tile_r)
    if r_pad != R:
        x = jnp.pad(x, ((0, 0), (0, r_pad - R), (0, 0)))
    n_rt = r_pad // tile_r

    in_specs = [
        pl.BlockSpec((1, tile_r, Din), lambda b, r: (b, r, 0)),
        pl.BlockSpec((1, S, Dslot), lambda b, r: (b, 0, 0)),
        pl.BlockSpec((Din, A), lambda b, r: (0, 0)),
        pl.BlockSpec((Dslot, A), lambda b, r: (0, 0)),
    ]
    args = [x, slot_latents, wq, wk]

    if layer_norm:
        g1, b1, g2, b2 = [jnp.reshape(p, (1, -1)).astype(jnp.float32)
                          for p in norm_params]
        in_specs += [
            pl.BlockSpec((1, Din), lambda b, r: (0, 0)),
            pl.BlockSpec((1, Din), lambda b, r: (0, 0)),
            pl.BlockSpec((1, Dslot), lambda b, r: (0, 0)),
            pl.BlockSpec((1, Dslot), lambda b, r: (0, 0)),
        ]
        args += [g1, b1, g2, b2]

    kernel = functools.partial(_mixing_kernel, scale=scale, layer_norm=layer_norm)

    out_shape = (
        jax.ShapeDtypeStruct((B, r_pad, Dslot), out_dtype),
        jax.ShapeDtypeStruct((B, S, r_pad), out_dtype),     # w stored transposed
    )
    out_specs = (
        pl.BlockSpec((1, tile_r, Dslot), lambda b, r: (b, r, 0)),
        pl.BlockSpec((1, S, tile_r), lambda b, r: (b, 0, r)),
    )

    out_bytes = jnp.dtype(out_dtype).itemsize
    flops = (2 * B * n_rt * (S * Dslot * A + Din * A * S)
             + 2 * B * (r_pad * Din * S + r_pad * S * Dslot))
    bytes_accessed = (x.size * x.dtype.itemsize
                      + slot_latents.size * slot_latents.dtype.itemsize
                      + wq.size * wq.dtype.itemsize
                      + wk.size * wk.dtype.itemsize
                      + B * r_pad * Dslot * out_bytes
                      + B * S * r_pad * out_bytes)
    cost = pl.CostEstimate(flops=flops,
                           transcendentals=B * r_pad * (S + 1),
                           bytes_accessed=bytes_accessed)

    s_out, w_t = pl.pallas_call(
        kernel,
        out_shape=out_shape,
        grid=(B, n_rt),
        in_specs=in_specs,
        out_specs=out_specs,
        compiler_params=pltpu.CompilerParams(
            dimension_semantics=("parallel", "parallel"),
            vmem_limit_bytes=32 * 1024 * 1024),
        cost_estimate=cost,
    )(*args)

    s_out = s_out[:, :R]
    if return_w_transposed:
        return s_out, w_t[:, :, :R]
    # Module contract is w[B, R, S]; this swapaxes is an extra XLA transpose in
    # HBM — prefer return_w_transposed=True when the consumer can take [B,S,R].
    return s_out, jnp.swapaxes(w_t, 1, 2)[:, :R]


# ---------------------------------------------------------------------------
# Pure-JAX reference (mirrors the PyTorch forward exactly).
# ---------------------------------------------------------------------------
def mixing_block_ref(x, slot_latents, wq, wk, *, layer_norm=False, norm_params=None):
    hp = lax.Precision.HIGHEST
    if layer_norm:
        g1, b1, g2, b2 = norm_params
        x = _layer_norm(x, jnp.reshape(g1, (1, -1)), jnp.reshape(b1, (1, -1)))
    A = wq.shape[1]
    q = jnp.einsum("bid,da->bia", x, wq, precision=hp)
    k = jnp.einsum("bsd,da->bsa", slot_latents, wk, precision=hp)
    dots = jnp.einsum("bia,bsa->bis", q, k, precision=hp) * (float(A) ** -0.5)
    w = jax.nn.softmax(dots, axis=2)
    s = jnp.einsum("bis,bsd->bid", w, slot_latents, precision=hp)
    if layer_norm:
        g1, b1, g2, b2 = norm_params
        s = _layer_norm(s, jnp.reshape(g2, (1, -1)), jnp.reshape(b2, (1, -1)))
    return s, w


if __name__ == "__main__":
    B, R, S = 2, 256, 8          # batch, num_rays, num_slots
    INPUT_DIM, SLOT_DIM, ATT_DIM = 32, 64, 32

    key = jax.random.PRNGKey(0)
    kx, ks, kq, kk, kg1, kb1, kg2, kb2 = jax.random.split(key, 8)

    x = jax.random.normal(kx, (B, R, INPUT_DIM), dtype=jnp.float32)
    slot_latents = jax.random.normal(ks, (B, S, SLOT_DIM), dtype=jnp.float32)
    wq = jax.random.normal(kq, (INPUT_DIM, ATT_DIM), jnp.float32) * (INPUT_DIM ** -0.5)
    wk = jax.random.normal(kk, (SLOT_DIM, ATT_DIM), jnp.float32) * (SLOT_DIM ** -0.5)

    def check(name, got, want, atol, rtol):
        if got.shape != want.shape:
            raise SystemExit(f"shape mismatch in {name}: {got.shape} vs {want.shape}")
        if not jnp.allclose(got, want, atol=atol, rtol=rtol):
            err = float(jnp.max(jnp.abs(got - want)))
            raise SystemExit(f"value mismatch in {name}: max abs err {err}")

    # 1) layer_norm=False, default tile (single ray tile per batch), f32 out.
    s_out, w_out = mixing_block(x, slot_latents, wq, wk, layer_norm=False)
    jax.block_until_ready((s_out, w_out))
    s_ref, w_ref = mixing_block_ref(x, slot_latents, wq, wk, layer_norm=False)
    check("s (f32)", s_out, s_ref, 2e-3, 2e-3)
    check("w (f32)", w_out, w_ref, 2e-3, 2e-3)

    # 2) layer_norm=True, ragged R (wrapper pads rays to the tile), 2 ray tiles.
    norm_params = (
        1.0 + 0.1 * jax.random.normal(kg1, (INPUT_DIM,), jnp.float32),
        0.1 * jax.random.normal(kb1, (INPUT_DIM,), jnp.float32),
        1.0 + 0.1 * jax.random.normal(kg2, (SLOT_DIM,), jnp.float32),
        0.1 * jax.random.normal(kb2, (SLOT_DIM,), jnp.float32),
    )
    Rr = 200
    s_ln, w_ln = mixing_block(x[:, :Rr], slot_latents, wq, wk, layer_norm=True,
                              norm_params=norm_params, tile_r=128)
    jax.block_until_ready((s_ln, w_ln))
    s_ln_ref, w_ln_ref = mixing_block_ref(x[:, :Rr], slot_latents, wq, wk,
                                          layer_norm=True, norm_params=norm_params)
    check("s (LN, ragged)", s_ln, s_ln_ref, 2e-3, 2e-3)
    check("w (LN, ragged)", w_ln, w_ln_ref, 2e-3, 2e-3)

    print("KERNEL_OK")
</pallas_src>

<mosaic_0001>
module attributes {stable_mosaic.version = 11 : i64} {
  func.func @_mixing_kernel(%arg0: i32, %arg1: i32, %arg2: memref<1x256x32xf32, #tpu.memory_space<vmem>>, %arg3: memref<1x8x64xf32, #tpu.memory_space<vmem>>, %arg4: memref<32x32xf32, #tpu.memory_space<vmem>>, %arg5: memref<64x32xf32, #tpu.memory_space<vmem>>, %arg6: memref<1x256x64xf32, #tpu.memory_space<vmem>>, %arg7: memref<1x8x256xf32, #tpu.memory_space<vmem>>) attributes {dimension_semantics = [#tpu.dimension_semantics<parallel>, #tpu.dimension_semantics<parallel>], iteration_bounds = array<i64: 2, 1>, scalar_prefetch = 0 : i64, scratch_operands = 0 : i64, tpu.core_type = #tpu.core_type<tc>, window_params = [{transform_indices = @transform_0, window_bounds = array<i64: 1, 256, 32>}, {transform_indices = @transform_1, window_bounds = array<i64: 1, 8, 64>}, {pipeline_mode = #tpu.pipeline_mode<synchronous>, transform_indices = @transform_2, window_bounds = array<i64: 32, 32>}, {pipeline_mode = #tpu.pipeline_mode<synchronous>, transform_indices = @transform_3, window_bounds = array<i64: 64, 32>}, {transform_indices = @transform_4, window_bounds = array<i64: 1, 256, 64>}, {transform_indices = @transform_5, window_bounds = array<i64: 1, 8, 256>}]} {
    %c0 = arith.constant 0 : index
    %c0_0 = arith.constant 0 : index
    %c0_1 = arith.constant 0 : index
    %0 = vector.load %arg3[%c0, %c0_0, %c0_1] : memref<1x8x64xf32, #tpu.memory_space<vmem>>, vector<1x8x64xf32>
    %1 = vector.shape_cast %0 : vector<1x8x64xf32> to vector<8x64xf32>
    %c0_2 = arith.constant 0 : index
    %c0_3 = arith.constant 0 : index
    %2 = vector.load %arg5[%c0_2, %c0_3] : memref<64x32xf32, #tpu.memory_space<vmem>>, vector<64x32xf32>
    %cst = arith.constant dense<0.000000e+00> : vector<8x32xf32>
    %3 = tpu.matmul %1, %2, %cst {dimension_numbers = #tpu.dot_dimension_numbers<[1], [0], [0], [1], [0, 0, 1, 1], [], []>} : vector<8x64xf32>, vector<64x32xf32>, vector<8x32xf32> -> vector<8x32xf32>
    %c0_4 = arith.constant 0 : index
    %c0_5 = arith.constant 0 : index
    %4 = vector.load %arg4[%c0_4, %c0_5] : memref<32x32xf32, #tpu.memory_space<vmem>>, vector<32x32xf32>
    %cst_6 = arith.constant dense<0.000000e+00> : vector<32x8xf32>
    %5 = tpu.matmul %4, %3, %cst_6 {dimension_numbers = #tpu.dot_dimension_numbers<[1], [1], [0], [0], [0, 0, 1, 0], [], []>} : vector<32x32xf32>, vector<8x32xf32>, vector<32x8xf32> -> vector<32x8xf32>
    %cst_7 = arith.constant 0.176776692 : f32
    %6 = vector.broadcast %cst_7 : f32 to vector<32x8xf32>
    %7 = arith.mulf %5, %6 : vector<32x8xf32>
    %c0_8 = arith.constant 0 : index
    %c0_9 = arith.constant 0 : index
    %c0_10 = arith.constant 0 : index
    %8 = vector.load %arg2[%c0_8, %c0_9, %c0_10] : memref<1x256x32xf32, #tpu.memory_space<vmem>>, vector<1x256x32xf32>
    %9 = vector.shape_cast %8 : vector<1x256x32xf32> to vector<256x32xf32>
    %cst_11 = arith.constant dense<0.000000e+00> : vector<8x256xf32>
    %10 = tpu.matmul %7, %9, %cst_11 {dimension_numbers = #tpu.dot_dimension_numbers<[0], [1], [1], [0], [0, 1, 1, 0], [], []>} : vector<32x8xf32>, vector<256x32xf32>, vector<8x256xf32> -> vector<8x256xf32>
    %cst_12 = arith.constant dense<0xFF800000> : vector<256xf32>
    %11 = vector.multi_reduction <maximumf>, %10, %cst_12 [0] : vector<8x256xf32> to vector<256xf32>
    %12 = vector.shape_cast %11 : vector<256xf32> to vector<1x256xf32>
    %13 = vector.broadcast %12 : vector<1x256xf32> to vector<8x256xf32>
    %14 = arith.subf %10, %13 : vector<8x256xf32>
    %15 = math.exp %14 : vector<8x256xf32>
    %cst_13 = arith.constant dense<0.000000e+00> : vector<256xf32>
    %16 = vector.multi_reduction <add>, %15, %cst_13 [0] : vector<8x256xf32> to vector<256xf32>
    %17 = vector.shape_cast %16 : vector<256xf32> to vector<1x256xf32>
    %18 = tpu.reciprocal %17 {approx = true} : vector<1x256xf32> -> vector<1x256xf32>
    %19 = arith.mulf %17, %18 : vector<1x256xf32>
    %cst_14 = arith.constant 2.000000e+00 : f32
    %20 = vector.broadcast %cst_14 : f32 to vector<1x256xf32>
    %21 = arith.subf %20, %19 : vector<1x256xf32>
    %22 = arith.mulf %18, %21 : vector<1x256xf32>
    %23 = vector.broadcast %22 : vector<1x256xf32> to vector<8x256xf32>
    %24 = arith.mulf %15, %23 : vector<8x256xf32>
    %cst_15 = arith.constant dense<0.000000e+00> : vector<256x64xf32>
    %25 = tpu.matmul %24, %1, %cst_15 {dimension_numbers = #tpu.dot_dimension_numbers<[0], [0], [1], [1], [0, 1, 1, 1], [], []>} : vector<8x256xf32>, vector<8x64xf32>, vector<256x64xf32> -> vector<256x64xf32>
    %c0_16 = arith.constant 0 : index
    %c0_17 = arith.constant 0 : index
    %c0_18 = arith.constant 0 : index
    %26 = vector.load %arg6[%c0_16, %c0_17, %c0_18] : memref<1x256x64xf32, #tpu.memory_space<vmem>>, vector<1x256x64xf32>
    %27 = vector.shape_cast %26 : vector<1x256x64xf32> to vector<256x64xf32>
    %28 = vector.shape_cast %25 : vector<256x64xf32> to vector<1x256x64xf32>
    tpu.vector_store %arg6[%c0_16, %c0_17, %c0_18], %28 {strides = array<i32>} : memref<1x256x64xf32, #tpu.memory_space<vmem>>, vector<1x256x64xf32>,
    %c0_19 = arith.constant 0 : index
    %c0_20 = arith.constant 0 : index
    %c0_21 = arith.constant 0 : index
    %29 = vector.load %arg7[%c0_19, %c0_20, %c0_21] : memref<1x8x256xf32, #tpu.memory_space<vmem>>, vector<1x8x256xf32>
    %30 = vector.shape_cast %29 : vector<1x8x256xf32> to vector<8x256xf32>
    %31 = vector.shape_cast %24 : vector<8x256xf32> to vector<1x8x256xf32>
    tpu.vector_store %arg7[%c0_19, %c0_20, %c0_21], %31 {strides = array<i32>} : memref<1x8x256xf32, #tpu.memory_space<vmem>>, vector<1x8x256xf32>,
    return
  }
  func.func @transform_0(%arg0: i32, %arg1: i32) -> (i32, i32, i32) {
    %c0_i32 = arith.constant 0 : i32
    %c0_i32_0 = arith.constant 0 : i32
    return %arg0, %arg1, %c0_i32 : i32, i32, i32
  }
  func.func @transform_1(%arg0: i32, %arg1: i32) -> (i32, i32, i32) {
    %c0_i32 = arith.constant 0 : i32
    %c0_i32_0 = arith.constant 0 : i32
    %c0_i32_1 = arith.constant 0 : i32
    return %arg0, %c0_i32, %c0_i32_0 : i32, i32, i32
  }
  func.func @transform_2(%arg0: i32, %arg1: i32) -> (i32, i32) {
    %c0_i32 = arith.constant 0 : i32
    %c0_i32_0 = arith.constant 0 : i32
    %c0_i32_1 = arith.constant 0 : i32
    return %c0_i32, %c0_i32_0 : i32, i32
  }
  func.func @transform_3(%arg0: i32, %arg1: i32) -> (i32, i32) {
    %c0_i32 = arith.constant 0 : i32
    %c0_i32_0 = arith.constant 0 : i32
    %c0_i32_1 = arith.constant 0 : i32
    return %c0_i32, %c0_i32_0 : i32, i32
  }
  func.func @transform_4(%arg0: i32, %arg1: i32) -> (i32, i32, i32) {
    %c0_i32 = arith.constant 0 : i32
    %c0_i32_0 = arith.constant 0 : i32
    return %arg0, %arg1, %c0_i32 : i32, i32, i32
  }
  func.func @transform_5(%arg0: i32, %arg1: i32) -> (i32, i32, i32) {
    %c0_i32 = arith.constant 0 : i32
    %c0_i32_0 = arith.constant 0 : i32
    return %arg0, %c0_i32, %arg1 : i32, i32, i32
  }
}

</mosaic_0001>

<llo_original>
// kernel: tpu_custom_call.1
$region0: #{tpu_custom_call.1}
  #allocation0 [shape = 'u32[]', space=smem, size = 0x4, offset = 0x4, fixed_abs, tag = 'smem constant byte address 0x4 - core index']
  #allocation1 [shape = 'u32[144,128]{1,0:T(1,128)}', space=vmem, size = 0x12000, scoped, tag = 'internal scratch']
  %s0 = inlined_call_operand.vmem [shape: f32[2,256,32], index: 0, kind: input, shape index: {}]
  %s1 = inlined_call_operand.vmem [shape: f32[2,8,64], index: 1, kind: input, shape index: {}]
  %s2 = inlined_call_operand.vmem [shape: f32[32,32], index: 2, kind: input, shape index: {}]
  %s3 = inlined_call_operand.vmem [shape: f32[64,32], index: 3, kind: input, shape index: {}]
  %s4 = inlined_call_operand.vmem [shape: f32[2,256,64], index: 4, kind: output, shape index: {0}]
  %s5 = inlined_call_operand.hbm [shape: f32[2,8,256], index: 5, kind: output, shape index: {1}]
  %6 = xla_tuple %s4, %s5
  %s7 = sld [smem:[#allocation0]]
  $region57: #{tpu_custom_call.1} parent=0
    _
  %s9 = ssub.s32 1, %s7
  %s10 = scalar_select 0, %s9, %s7
  $region1: #{tpu_custom_call.1} parent=0
    #allocation2 [shape = 'u8[16384]{0}', space=vmem, size = 0x4000, scoped, tag = 'output window, operand 1']
    #allocation3 [shape = 's32[2]{0}', space=sflag, size = 0x8, scoped, tag = 'scoped memory for tpu_custom_call.1']
    %11 = vsyncpa [#allocation3], 0
    %s12 = scalar_lea.sflag [#allocation3], 1
    %13 = vsyncpa %s12, 0
    loop: start=0, step=1, limit=4
    $region2: #{tpu_custom_call.1} parent=1 // loop_pre_header
      _
    $region3: #{tpu_custom_call.1} parent=1 // loop_header
      %s15 = sphi 0, %s19
      %p16 = scmp.ge.s32.totalorder %s15, 4
      %s22 = sphi 0, %s34
      %s23 = sphi 0, %s30
      %s24 = sphi 0, %s22
      %s25 = sphi 0, %s23
      %s26 = sphi 0, %s24
      %s27 = sphi 0, %s25
      %s39 = sphi 0, %s41
      %s42 = sphi 0, %s39
      %s43 = sphi 0, %s42
      %s59 = sphi 0, %s43
      %s65 = sphi 0, %s67
      %s68 = sphi 0, %s65
      %s69 = sphi 0, %s68
      %s85 = sphi 0, %s69
      %s89 = sphi 0, %s89
      %s91 = sphi 0, %s89
      %s92 = sphi 0, %s91
      %s106 = sphi 0, %s92
      %s110 = sphi 0, %s110
      %s112 = sphi 0, %s110
      %s113 = sphi 0, %s112
      %s127 = sphi 0, %s113
      %s135 = sphi 0, %s137
      %s138 = sphi 0, %s135
      %s139 = sphi 0, %s138
      %s155 = sphi 0, %s139
      %s163 = sphi 0, %s165
      %s166 = sphi 0, %s163
      %s167 = sphi 0, %s166
      %s183 = sphi 0, %s167
    $region4: #{tpu_custom_call.1} parent=1 // loop_header_branch
      %18 = sbr.rel (%p16) target = $region8
    $region5: #{tpu_custom_call.1} parent=1 // loop_body
      %s20 = ssub.s32 %s15, 1
      %s21 = ssub.s32 %s15, 2
      %s28 = sadd.s32 1, %s23
      %p29 = scmp.ge.s32.totalorder %s28, 1
      %s30 = scalar_select %p29, 0, %s28
      %s31 = sadd.s32 1, %s22
      %s32 = scalar_select %p29, %s31, %s22
      %p33 = scmp.ge.s32.totalorder %s32, 2
      %s34 = scalar_select %p33, 0, %s32
      %s35 = ssub.s32 %s22, %s34
      %s36 = ssub.s32 %s23, %s30
      %s37 = sor.u32 %s35, %s36
      %p38 = scmp.eq.s32.totalorder %s37, 0
      %s40 = sadd.s32 %s39, 1
      %s41 = scalar_select %p38, %s39, %s40
      %p44 = pneg %p38
      %p45 = scmp.eq.s32.totalorder %s15, 1
      %p46 = por %p44, %p45
      %p47 = scmp.ne.s32.totalorder %s39, %s42
      %p48 = scmp.eq.s32.totalorder %s15, 0
      %p49 = por %p47, %p48
      %p50 = scmp.ne.s32.totalorder %s39, %s42
      %p51 = scmp.eq.s32.totalorder %s20, 1
      %p52 = por %p50, %p51
      %p53 = scmp.ne.s32.totalorder %s42, %s43
      %p54 = scmp.eq.s32.totalorder %s20, 0
      %p55 = por %p53, %p54
      %p56 = scmp.ne.s32.totalorder %s42, %s43
      %p57 = scmp.eq.s32.totalorder %s21, 1
      %p58 = por %p56, %p57
      %p60 = scmp.ne.s32.totalorder %s43, %s59
      %p61 = scmp.eq.s32.totalorder %s21, 0
      %p62 = por %p60, %p61
      %s63 = ssub.s32 %s22, %s34
      %p64 = scmp.eq.s32.totalorder %s63, 0
      %s66 = sadd.s32 %s65, 1
      %s67 = scalar_select %p64, %s65, %s66
      %p70 = pneg %p64
      %p71 = scmp.eq.s32.totalorder %s15, 1
      %p72 = por %p70, %p71
      %p73 = scmp.ne.s32.totalorder %s65, %s68
      %p74 = scmp.eq.s32.totalorder %s15, 0
      %p75 = por %p73, %p74
      %p76 = scmp.ne.s32.totalorder %s65, %s68
      %p77 = scmp.eq.s32.totalorder %s20, 1
      %p78 = por %p76, %p77
      %p79 = scmp.ne.s32.totalorder %s68, %s69
      %p80 = scmp.eq.s32.totalorder %s20, 0
      %p81 = por %p79, %p80
      %p82 = scmp.ne.s32.totalorder %s68, %s69
      %p83 = scmp.eq.s32.totalorder %s21, 1
      %p84 = por %p82, %p83
      %p86 = scmp.ne.s32.totalorder %s69, %s85
      %p87 = scmp.eq.s32.totalorder %s21, 0
      %p88 = por %p86, %p87
      %s90 = sadd.s32 %s89, 1
      %p93 = scmp.eq.s32.totalorder %s15, 1
      %p94 = scmp.ne.s32.totalorder %s89, %s91
      %p95 = scmp.eq.s32.totalorder %s15, 0
      %p96 = por %p94, %p95
      %p97 = scmp.ne.s32.totalorder %s89, %s91
      %p98 = scmp.eq.s32.totalorder %s20, 1
      %p99 = por %p97, %p98
      %p100 = scmp.ne.s32.totalorder %s91, %s92
      %p101 = scmp.eq.s32.totalorder %s20, 0
      %p102 = por %p100, %p101
      %p103 = scmp.ne.s32.totalorder %s91, %s92
      %p104 = scmp.eq.s32.totalorder %s21, 1
      %p105 = por %p103, %p104
      %p107 = scmp.ne.s32.totalorder %s92, %s106
      %p108 = scmp.eq.s32.totalorder %s21, 0
      %p109 = por %p107, %p108
      %s111 = sadd.s32 %s110, 1
      %p114 = scmp.eq.s32.totalorder %s15, 1
      %p115 = scmp.ne.s32.totalorder %s110, %s112
      %p116 = scmp.eq.s32.totalorder %s15, 0
      %p117 = por %p115, %p116
      %p118 = scmp.ne.s32.totalorder %s110, %s112
      %p119 = scmp.eq.s32.totalorder %s20, 1
      %p120 = por %p118, %p119
      %p121 = scmp.ne.s32.totalorder %s112, %s113
      %p122 = scmp.eq.s32.totalorder %s20, 0
      %p123 = por %p121, %p122
      %p124 = scmp.ne.s32.totalorder %s112, %s113
      %p125 = scmp.eq.s32.totalorder %s21, 1
      %p126 = por %p124, %p125
      %p128 = scmp.ne.s32.totalorder %s113, %s127
      %p129 = scmp.eq.s32.totalorder %s21, 0
      %p130 = por %p128, %p129
      %s131 = ssub.s32 %s22, %s34
      %s132 = ssub.s32 %s23, %s30
      %s133 = sor.u32 %s131, %s132
      %p134 = scmp.eq.s32.totalorder %s133, 0
      %s136 = sadd.s32 %s135, 1
      %s137 = scalar_select %p134, %s135, %s136
      %p140 = pneg %p134
      %p141 = scmp.eq.s32.totalorder %s15, 1
      %p142 = por %p140, %p141
      %p143 = scmp.ne.s32.totalorder %s135, %s138
      %p144 = scmp.eq.s32.totalorder %s15, 0
      %p145 = por %p143, %p144
      %p146 = scmp.ne.s32.totalorder %s135, %s138
      %p147 = scmp.eq.s32.totalorder %s20, 1
      %p148 = por %p146, %p147
      %p149 = scmp.ne.s32.totalorder %s138, %s139
      %p150 = scmp.eq.s32.totalorder %s20, 0
      %p151 = por %p149, %p150
      %p152 = scmp.ne.s32.totalorder %s138, %s139
      %p153 = scmp.eq.s32.totalorder %s21, 1
      %p154 = por %p152, %p153
      %p156 = scmp.ne.s32.totalorder %s139, %s155
      %p157 = scmp.eq.s32.totalorder %s21, 0
      %p158 = por %p156, %p157
      %s159 = ssub.s32 %s22, %s34
      %s160 = ssub.s32 %s23, %s30
      %s161 = sor.u32 %s159, %s160
      %p162 = scmp.eq.s32.totalorder %s161, 0
      %s164 = sadd.s32 %s163, 1
      %s165 = scalar_select %p162, %s163, %s164
      %p168 = pneg %p162
      %p169 = scmp.eq.s32.totalorder %s15, 1
      %p170 = por %p168, %p169
      %p171 = scmp.ne.s32.totalorder %s163, %s166
      %p172 = scmp.eq.s32.totalorder %s15, 0
      %p173 = por %p171, %p172
      %p174 = scmp.ne.s32.totalorder %s163, %s166
      %p175 = scmp.eq.s32.totalorder %s20, 1
      %p176 = por %p174, %p175
      %p177 = scmp.ne.s32.totalorder %s166, %s167
      %p178 = scmp.eq.s32.totalorder %s20, 0
      %p179 = por %p177, %p178
      %p180 = scmp.ne.s32.totalorder %s166, %s167
      %p181 = scmp.eq.s32.totalorder %s21, 1
      %p182 = por %p180, %p181
      %p184 = scmp.ne.s32.totalorder %s167, %s183
      %p185 = scmp.eq.s32.totalorder %s21, 0
      %p186 = por %p184, %p185
      %p187 = scmp.le.s32.totalorder 1, %s15
      %p188 = scmp.lt.s32.totalorder %s15, 3
      %p189 = pnand %p187, %p188
      %p190 = pneg %p189
      // Predicated region
      $region9: #{tpu_custom_call.1} parent=5 // pred_check
        _
      $region10: #{tpu_custom_call.1} parent=5 // pred_check_branch
        %192 = sbr.rel (%p189) target = $region12
      $region11: #{tpu_custom_call.1} parent=5 // pred_region
        %s193 = ssub.s32 %s15, 1
        // Predicated region
        $region13: #{tpu_custom_call.1} parent=11 // pred_check
          %p194 = pneg %p102
        $region14: #{tpu_custom_call.1} parent=11 // pred_check_branch
          %196 = sbr.rel (%p194) target = $region16
        $region15: #{tpu_custom_call.1} parent=11 // pred_region
          _
        $region16: #{tpu_custom_call.1} parent=11 // pred_fallthru
          _
        // Predicated region
        $region17: #{tpu_custom_call.1} parent=11 // pred_check
          %p197 = pneg %p123
        $region18: #{tpu_custom_call.1} parent=11 // pred_check_branch
          %199 = sbr.rel (%p197) target = $region20
        $region19: #{tpu_custom_call.1} parent=11 // pred_region
          _
        $region20: #{tpu_custom_call.1} parent=11 // pred_fallthru
          _
      $region12: #{tpu_custom_call.1} parent=5 // pred_fallthru
        _
      %p200 = scmp.lt.s32.totalorder %s15, 2
      // Predicated region
      $region21: #{tpu_custom_call.1} parent=5 // pred_check
        %p201 = pneg %p200
      $region22: #{tpu_custom_call.1} parent=5 // pred_check_branch
        %203 = sbr.rel (%p201) target = $region24
      $region23: #{tpu_custom_call.1} parent=5 // pred_region
        // Predicated region
        $region25: #{tpu_custom_call.1} parent=23 // pred_check
          %p204 = pneg %p49
        $region26: #{tpu_custom_call.1} parent=23 // pred_check_branch
          %206 = sbr.rel (%p204) target = $region28
        $region27: #{tpu_custom_call.1} parent=23 // pred_region
          %s207 = smul.u32 32, %s23
          %p208 = scmp.lt.s32.totalorder %s22, 1
          %s209 = scalar_select %p208, %s22, 1
          %p210 = scmp.lt.s32.totalorder %s207, 31
          %s211 = scalar_select %p210, %s207, 31
          %s212 = smul.addr %s209, 32
          %s213 = sadd.s32 %s211, %s212
          %s214 = smul.addr %s213, 8
          %s215 = scalar_lea.vmem %s0, %s214
          %s216 = smul.u32 32, %s23
        $region28: #{tpu_custom_call.1} parent=23 // pred_fallthru
          _
        // Predicated region
        $region29: #{tpu_custom_call.1} parent=23 // pred_check
          %p217 = pneg %p75
        $region30: #{tpu_custom_call.1} parent=23 // pred_check_branch
          %219 = sbr.rel (%p217) target = $region32
        $region31: #{tpu_custom_call.1} parent=23 // pred_region
          %p220 = scmp.lt.s32.totalorder %s22, 1
          %s221 = scalar_select %p220, %s22, 1
          %s222 = smul.addr %s221, 8
          %s223 = scalar_lea.vmem %s1, %s222
        $region32: #{tpu_custom_call.1} parent=23 // pred_fallthru
          _
      $region24: #{tpu_custom_call.1} parent=5 // pred_fallthru
        _
      %p224 = scmp.le.s32.totalorder 1, %s15
      %p225 = scmp.lt.s32.totalorder %s15, 3
      %p226 = pnand %p224, %p225
      %p227 = pneg %p226
      // Predicated region
      $region33: #{tpu_custom_call.1} parent=5 // pred_check
        _
      $region34: #{tpu_custom_call.1} parent=5 // pred_check_branch
        %229 = sbr.rel (%p226) target = $region36
      $region35: #{tpu_custom_call.1} parent=5 // pred_region
        %s230 = ssub.s32 %s15, 1
        %s231 = smul.u32 32, %s25
        %p232 = scmp.lt.s32.totalorder %s24, 1
        %s233 = scalar_select %p232, %s24, 1
        %p234 = scmp.lt.s32.totalorder %s231, 31
        %s235 = scalar_select %p234, %s231, 31
        %s236 = smul.addr %s233, 32
        %s237 = sadd.s32 %s235, %s236
        %s238 = smul.addr %s237, 8
        %s239 = scalar_lea.vmem %s0, %s238
        %p240 = pneg %p55
        %p241 = pneg %p52
        %p242 = scmp.lt.s32.totalorder %s24, 1
        %s243 = scalar_select %p242, %s24, 1
        %s244 = smul.addr %s243, 8
        %s245 = scalar_lea.vmem %s1, %s244
        %p246 = pneg %p81
        %p247 = pneg %p78
        %p248 = pneg %p102
        %p249 = pneg %p99
        %p250 = pneg %p123
        %p251 = pneg %p120
        %p252 = pneg %p151
        %p253 = pneg %p148
        %s254 = smul.u32 32, %s25
        %p255 = scmp.lt.s32.totalorder %s24, 1
        %s256 = scalar_select %p255, %s24, 1
        %p257 = scmp.lt.s32.totalorder %s254, 31
        %s258 = scalar_select %p257, %s254, 31
        %s259 = smul.addr %s256, 32
        %s260 = sadd.s32 %s258, %s259
        %s261 = smul.addr %s260, 8
        %s262 = scalar_lea.vmem %s4, %s261
        %p263 = pneg %p179
        %p264 = pneg %p176
        %s265 = sand.u32 %s166, 1
        %s266 = scalar_lea.sflag [#allocation3], %s265
        %s267 = sand.u32 %s166, 1
        %s268 = smul.addr %s267, 16
        %s269 = scalar_lea.vmem [#allocation2], %s268
        %s270 = smul.u32 32, %s25
        %p271 = scmp.lt.s32.totalorder %s24, 1
        %s272 = scalar_select %p271, %s24, 1
        %p273 = scmp.lt.s32.totalorder %s270, 31
        %s274 = scalar_select %p273, %s270, 31
        %s275 = smul.addr %s272, 32
        %s276 = sadd.s32 %s274, %s275
        %s277 = smul.addr %s276, 8
        %s278 = scalar_lea.vmem %s0, %s277
        %s279 = smul.u32 32, %s25
        %p280 = scmp.lt.s32.totalorder %s24, 1
        %s281 = scalar_select %p280, %s24, 1
        %s282 = smul.addr %s281, 8
        %s283 = scalar_lea.vmem %s1, %s282
        %s284 = smul.u32 32, %s25
        %p285 = scmp.lt.s32.totalorder %s24, 1
        %s286 = scalar_select %p285, %s24, 1
        %p287 = scmp.lt.s32.totalorder %s284, 31
        %s288 = scalar_select %p287, %s284, 31
        %s289 = smul.addr %s286, 32
        %s290 = sadd.s32 %s288, %s289
        %s291 = smul.addr %s290, 8
        %s292 = scalar_lea.vmem %s4, %s291
        %s293 = smul.u32 32, %s25
        %s294 = smul.u32 2, %s25
        %v295 = vld [vmem:[%s283] sm:$0xff]
        %v296 = vld [vmem:[%s3] sm:$0xff]
        %v297 = vld [vmem:[%s3 + $0x8] sm:$0xff]
        %v298 = vld [vmem:[%s3 + $0x10] sm:$0xff]
        %v299 = vld [vmem:[%s3 + $0x18] sm:$0xff]
        %v300 = vld [vmem:[%s3 + $0x20] sm:$0xff]
        %v301 = vld [vmem:[%s3 + $0x28] sm:$0xff]
        %v302 = vld [vmem:[%s3 + $0x30] sm:$0xff]
        %v303 = vld [vmem:[%s3 + $0x38] sm:$0xff]
        %vm304 = vcmask 523264
        %v306 = vsel %vm304, %v295, 0
        %308 = vmatprep.subr.mxu0 0.0
        %309 = vmatpush1.msra.mxu0 %v296
        %310 = vmatprep.subr.mxu0 0.0
        %311 = vmatpush1.msra.mxu0 %v297
        %312 = vmatprep.subr.mxu0 0.0
        %313 = vmatpush1.msra.mxu0 %v298
        %314 = vmatprep.subr.mxu0 0.0
        %315 = vmatpush1.msra.mxu0 %v299
        %316 = vmatprep.subr.mxu0 0.0
        %317 = vmatpush1.msra.mxu0 %v300
        %318 = vmatprep.subr.mxu0 0.0
        %319 = vmatpush1.msra.mxu0 %v301
        %320 = vmatprep.subr.mxu0 0.0
        %321 = vmatpush1.msra.mxu0 %v302
        %322 = vmatprep.subr.mxu0 0.0
        %323 = vmatpush1.msra.mxu0 %v303
        %324 = vmatprep.subr.mxu0 0.0
        %325 = vmatpush1.msra.mxu0 0.0
        %326 = vmatprep.subr.mxu0 0.0
        %327 = vmatpush1.msra.mxu0 0.0
        %328 = vmatprep.subr.mxu0 0.0
        %329 = vmatpush1.msra.mxu0 0.0
        %330 = vmatprep.subr.mxu0 0.0
        %331 = vmatpush1.msra.mxu0 0.0
        %332 = vmatprep.subr.mxu0 0.0
        %333 = vmatpush1.msra.mxu0 0.0
        %334 = vmatprep.subr.mxu0 0.0
        %335 = vmatpush1.msra.mxu0 0.0
        %336 = vmatprep.subr.mxu0 0.0
        %337 = vmatpush1.msra.mxu0 0.0
        %338 = vmatprep.subr.mxu0 0.0
        %339 = vmatpush1.msra.mxu0 0.0
        %340 = vmatprep.subr.mxu0 0.0
        %341 = vmatpush1.msra.mxu0 0.0
        %342 = vmatprep.subr.mxu0 0.0
        %343 = vmatpush1.msra.mxu0 0.0
        %344 = vmatprep.subr.mxu0 0.0
        %345 = vmatpush1.msra.mxu0 0.0
        %346 = vmatprep.subr.mxu0 0.0
        %347 = vmatpush1.msra.mxu0 0.0
        %348 = vmatprep.subr.mxu0 0.0
        %349 = vmatpush1.msra.mxu0 0.0
        %350 = vmatprep.subr.mxu0 0.0
        %351 = vmatpush1.msra.mxu0 0.0
        %352 = vmatprep.subr.mxu0 0.0
        %353 = vmatpush1.msra.mxu0 0.0
        %354 = vmatprep.subr.mxu0 0.0
        %355 = vmatpush1.msra.mxu0 0.0
        %356 = vmatprep.subr.mxu0 0.0
        %357 = vmatpush1.msra.mxu0 0.0
        %358 = vmatprep.subr.mxu0 0.0
        %359 = vmatpush1.msra.mxu0 0.0
        %360 = vmatprep.subr.mxu0 0.0
        %361 = vmatpush1.msra.mxu0 0.0
        %362 = vmatprep.subr.mxu0 0.0
        %363 = vmatpush1.msra.mxu0 0.0
        %364 = vmatprep.subr.mxu0 0.0
        %365 = vmatpush1.msra.mxu0 0.0
        %366 = vmatprep.subr.mxu0 0.0
        %367 = vmatpush1.msra.mxu0 0.0
        %368 = vmatprep.subr.mxu0 0.0
        %369 = vmatpush1.msra.mxu0 0.0
        %370 = vmatprep.subr.mxu0 0.0
        %371 = vmatpush1.msra.mxu0 0.0
        %372 = vmatprep.mubr.f32.mxu0 0.0
        %373 = vmatmul.mubr.f32.gmra.mrb[0].mxu0 %v306
        %v374 = vpop.f32.mrb[0].mxu0
        %v375 = vadd.f32 0.0, %v374
        %v376 = vpop.f32.mrb[0].mxu0
        %377 = vdwg.mxu0
        %v378 = vld [vmem:[%s2] sm:$0xff]
        %v379 = vld [vmem:[%s2 + $0x8] sm:$0xff]
        %v380 = vld [vmem:[%s2 + $0x10] sm:$0xff]
        %v381 = vld [vmem:[%s2 + $0x18] sm:$0xff]
        %vm382 = vcmask 261120
        %v384 = vsel %vm382, %v378, 0
        %v387 = vsel %vm382, %v379, 0
        %v390 = vsel %vm382, %v380, 0
        %v393 = vsel %vm382, %v381, 0
        %v396 = vsel %vm382, %v375, 0
        %398 = vmatprep.subr.mxu0 0.0
        %399 = vmatpush1.xpose.msra.mxu0 %v396
        %400 = vmatprep.subr.mxu0 0.0
        %401 = vmatpush1.xpose.msra.mxu0 0.0
        %402 = vmatprep.subr.mxu0 0.0
        %403 = vmatpush1.xpose.msra.mxu0 0.0
        %404 = vmatprep.subr.mxu0 0.0
        %405 = vmatpush1.xpose.msra.mxu0 0.0
        %406 = vmatprep.subr.mxu0 0.0
        %407 = vmatpush1.xpose.msra.mxu0 0.0
        %408 = vmatprep.subr.mxu0 0.0
        %409 = vmatpush1.xpose.msra.mxu0 0.0
        %410 = vmatprep.subr.mxu0 0.0
        %411 = vmatpush1.xpose.msra.mxu0 0.0
        %412 = vmatprep.subr.mxu0 0.0
        %413 = vmatpush1.xpose.msra.mxu0 0.0
        %414 = vmatprep.subr.mxu0 0.0
        %415 = vmatpush1.xpose.msra.mxu0 0.0
        %416 = vmatprep.subr.mxu0 0.0
        %417 = vmatpush1.xpose.msra.mxu0 0.0
        %418 = vmatprep.subr.mxu0 0.0
        %419 = vmatpush1.xpose.msra.mxu0 0.0
        %420 = vmatprep.subr.mxu0 0.0
        %421 = vmatpush1.xpose.msra.mxu0 0.0
        %422 = vmatprep.subr.mxu0 0.0
        %423 = vmatpush1.xpose.msra.mxu0 0.0
        %424 = vmatprep.subr.mxu0 0.0
        %425 = vmatpush1.xpose.msra.mxu0 0.0
        %426 = vmatprep.subr.mxu0 0.0
        %427 = vmatpush1.xpose.msra.mxu0 0.0
        %428 = vmatprep.subr.mxu0 0.0
        %429 = vmatpush1.xpose.msra.mxu0 0.0
        %430 = vmatprep.subr.mxu0 0.0
        %431 = vmatpush1.xpose.msra.mxu0 0.0
        %432 = vmatprep.subr.mxu0 0.0
        %433 = vmatpush1.xpose.msra.mxu0 0.0
        %434 = vmatprep.subr.mxu0 0.0
        %435 = vmatpush1.xpose.msra.mxu0 0.0
        %436 = vmatprep.subr.mxu0 0.0
        %437 = vmatpush1.xpose.msra.mxu0 0.0
        %438 = vmatprep.subr.mxu0 0.0
        %439 = vmatpush1.xpose.msra.mxu0 0.0
        %440 = vmatprep.subr.mxu0 0.0
        %441 = vmatpush1.xpose.msra.mxu0 0.0
        %442 = vmatprep.subr.mxu0 0.0
        %443 = vmatpush1.xpose.msra.mxu0 0.0
        %444 = vmatprep.subr.mxu0 0.0
        %445 = vmatpush1.xpose.msra.mxu0 0.0
        %446 = vmatprep.subr.mxu0 0.0
        %447 = vmatpush1.xpose.msra.mxu0 0.0
        %448 = vmatprep.subr.mxu0 0.0
        %449 = vmatpush1.xpose.msra.mxu0 0.0
        %450 = vmatprep.subr.mxu0 0.0
        %451 = vmatpush1.xpose.msra.mxu0 0.0
        %452 = vmatprep.subr.mxu0 0.0
        %453 = vmatpush1.xpose.msra.mxu0 0.0
        %454 = vmatprep.subr.mxu0 0.0
        %455 = vmatpush1.xpose.msra.mxu0 0.0
        %456 = vmatprep.subr.mxu0 0.0
        %457 = vmatpush1.xpose.msra.mxu0 0.0
        %458 = vmatprep.subr.mxu0 0.0
        %459 = vmatpush1.xpose.msra.mxu0 0.0
        %460 = vmatprep.subr.mxu0 0.0
        %461 = vmatpush1.xpose.msra.mxu0 0.0
        %462 = vmatprep.mubr.f32.mxu0 0.0
        %463 = vmatmul.mubr.f32.gmra.mrb[0].mxu0 %v384
        %v464 = vpop.f32.mrb[0].mxu0
        %v465 = vadd.f32 0.0, %v464
        %v466 = vpop.f32.mrb[0].mxu0
        %467 = vmatprep.mubr.f32.mxu0 0.0
        %468 = vmatmul.mubr.f32.gmra.mrb[0].mxu0 %v387
        %v469 = vpop.f32.mrb[0].mxu0
        %v470 = vadd.f32 0.0, %v469
        %v471 = vpop.f32.mrb[0].mxu0
        %472 = vmatprep.mubr.f32.mxu0 0.0
        %473 = vmatmul.mubr.f32.gmra.mrb[0].mxu0 %v390
        %v474 = vpop.f32.mrb[0].mxu0
        %v475 = vadd.f32 0.0, %v474
        %v476 = vpop.f32.mrb[0].mxu0
        %477 = vmatprep.mubr.f32.mxu0 0.0
        %478 = vmatmul.mubr.f32.gmra.mrb[0].mxu0 %v393
        %v479 = vpop.f32.mrb[0].mxu0
        %v480 = vadd.f32 0.0, %v479
        %v481 = vpop.f32.mrb[0].mxu0
        %482 = vdwg.mxu0
        %v483 = vmul.f32 %v465, 0.17677669
        %v484 = vmul.f32 %v470, 0.17677669
        %v485 = vmul.f32 %v475, 0.17677669
        %v486 = vmul.f32 %v480, 0.17677669
        %v487 = vld [vmem:[%s278] sm:$0xff]
        %v488 = vld [vmem:[%s278 + $0x8] sm:$0xff]
        %v489 = vld [vmem:[%s278 + $0x10] sm:$0xff]
        %v490 = vld [vmem:[%s278 + $0x18] sm:$0xff]
        %v491 = vld [vmem:[%s278 + $0x20] sm:$0xff]
        %v492 = vld [vmem:[%s278 + $0x28] sm:$0xff]
        %v493 = vld [vmem:[%s278 + $0x30] sm:$0xff]
        %v494 = vld [vmem:[%s278 + $0x38] sm:$0xff]
        %v495 = vld [vmem:[%s278 + $0x40] sm:$0xff]
        %v496 = vld [vmem:[%s278 + $0x48] sm:$0xff]
        %v497 = vld [vmem:[%s278 + $0x50] sm:$0xff]
        %v498 = vld [vmem:[%s278 + $0x58] sm:$0xff]
        %v499 = vld [vmem:[%s278 + $0x60] sm:$0xff]
        %v500 = vld [vmem:[%s278 + $0x68] sm:$0xff]
        %v501 = vld [vmem:[%s278 + $0x70] sm:$0xff]
        %v502 = vld [vmem:[%s278 + $0x78] sm:$0xff]
        %v503 = vld [vmem:[%s278 + $0x80] sm:$0xff]
        %v504 = vld [vmem:[%s278 + $0x88] sm:$0xff]
        %v505 = vld [vmem:[%s278 + $0x90] sm:$0xff]
        %v506 = vld [vmem:[%s278 + $0x98] sm:$0xff]
        %v507 = vld [vmem:[%s278 + $0xa0] sm:$0xff]
        %v508 = vld [vmem:[%s278 + $0xa8] sm:$0xff]
        %v509 = vld [vmem:[%s278 + $0xb0] sm:$0xff]
        %v510 = vld [vmem:[%s278 + $0xb8] sm:$0xff]
        %v511 = vld [vmem:[%s278 + $0xc0] sm:$0xff]
        %v512 = vld [vmem:[%s278 + $0xc8] sm:$0xff]
        %v513 = vld [vmem:[%s278 + $0xd0] sm:$0xff]
        %v514 = vld [vmem:[%s278 + $0xd8] sm:$0xff]
        %v515 = vld [vmem:[%s278 + $0xe0] sm:$0xff]
        %v516 = vld [vmem:[%s278 + $0xe8] sm:$0xff]
        %v517 = vld [vmem:[%s278 + $0xf0] sm:$0xff]
        %v518 = vld [vmem:[%s278 + $0xf8] sm:$0xff]
        %519 = vxpose.xlu0.b32.start [1/16] %v483, 128
        %520 = vxpose.xlu0.b32.cont [2/16] %v484, 128
        %521 = vxpose.xlu0.b32.cont [3/16] %v485, 128
        %522 = vxpose.xlu0.b32.cont [4/16] %v486, 128
        %523 = vxpose.xlu0.b32.cont [5/16] 0.0, 128
        %524 = vxpose.xlu0.b32.cont [6/16] 0.0, 128
        %525 = vxpose.xlu0.b32.cont [7/16] 0.0, 128
        %526 = vxpose.xlu0.b32.cont [8/16] 0.0, 128
        %527 = vxpose.xlu0.b32.cont [9/16] 0.0, 128
        %528 = vxpose.xlu0.b32.cont [10/16] 0.0, 128
        %529 = vxpose.xlu0.b32.cont [11/16] 0.0, 128
        %530 = vxpose.xlu0.b32.cont [12/16] 0.0, 128
        %531 = vxpose.xlu0.b32.cont [13/16] 0.0, 128
        %532 = vxpose.xlu0.b32.cont [14/16] 0.0, 128
        %533 = vxpose.xlu0.b32.cont [15/16] 0.0, 128
        %534 = vxpose.xlu0.b32.end [16/16] 0.0, 128
        %v535 = vpop.trf.xlu0
        %v536 = vpop.trf.xlu0
        %v537 = vpop.trf.xlu0
        %v538 = vpop.trf.xlu0
        %v539 = vpop.trf.xlu0
        %v540 = vpop.trf.xlu0
        %v541 = vpop.trf.xlu0
        %v542 = vpop.trf.xlu0
        %v543 = vpop.trf.xlu0
        %v544 = vpop.trf.xlu0
        %v545 = vpop.trf.xlu0
        %v546 = vpop.trf.xlu0
        %v547 = vpop.trf.xlu0
        %v548 = vpop.trf.xlu0
        %v549 = vpop.trf.xlu0
        %v550 = vpop.trf.xlu0
        %v552 = vsel %vm382, %v535, 0
        %v555 = vsel %vm382, %v487, 0
        %v558 = vsel %vm382, %v488, 0
        %v561 = vsel %vm382, %v489, 0
        %v564 = vsel %vm382, %v490, 0
        %v567 = vsel %vm382, %v491, 0
        %v570 = vsel %vm382, %v492, 0
        %v573 = vsel %vm382, %v493, 0
        %v576 = vsel %vm382, %v494, 0
        %v579 = vsel %vm382, %v495, 0
        %v582 = vsel %vm382, %v496, 0
        %v585 = vsel %vm382, %v497, 0
        %v588 = vsel %vm382, %v498, 0
        %v591 = vsel %vm382, %v499, 0
        %v594 = vsel %vm382, %v500, 0
        %v597 = vsel %vm382, %v501, 0
        %v600 = vsel %vm382, %v502, 0
        %v603 = vsel %vm382, %v503, 0
        %v606 = vsel %vm382, %v504, 0
        %v609 = vsel %vm382, %v505, 0
        %v612 = vsel %vm382, %v506, 0
        %v615 = vsel %vm382, %v507, 0
        %v618 = vsel %vm382, %v508, 0
        %v621 = vsel %vm382, %v509, 0
        %v624 = vsel %vm382, %v510, 0
        %v627 = vsel %vm382, %v511, 0
        %v630 = vsel %vm382, %v512, 0
        %v633 = vsel %vm382, %v513, 0
        %v636 = vsel %vm382, %v514, 0
        %v639 = vsel %vm382, %v515, 0
        %v642 = vsel %vm382, %v516, 0
        %v645 = vsel %vm382, %v517, 0
        %v648 = vsel %vm382, %v518, 0
        %650 = vmatprep.subr.mxu0 0.0
        %651 = vmatpush1.xpose.msra.mxu0 %v555
        %652 = vmatprep.subr.mxu0 0.0
        %653 = vmatpush1.xpose.msra.mxu0 %v558
        %654 = vmatprep.subr.mxu0 0.0
        %655 = vmatpush1.xpose.msra.mxu0 %v561
        %656 = vmatprep.subr.mxu0 0.0
        %657 = vmatpush1.xpose.msra.mxu0 %v564
        %658 = vmatprep.subr.mxu0 0.0
        %659 = vmatpush1.xpose.msra.mxu0 %v567
        %660 = vmatprep.subr.mxu0 0.0
        %661 = vmatpush1.xpose.msra.mxu0 %v570
        %662 = vmatprep.subr.mxu0 0.0
        %663 = vmatpush1.xpose.msra.mxu0 %v573
        %664 = vmatprep.subr.mxu0 0.0
        %665 = vmatpush1.xpose.msra.mxu0 %v576
        %666 = vmatprep.subr.mxu0 0.0
        %667 = vmatpush1.xpose.msra.mxu0 %v579
        %668 = vmatprep.subr.mxu0 0.0
        %669 = vmatpush1.xpose.msra.mxu0 %v582
        %670 = vmatprep.subr.mxu0 0.0
        %671 = vmatpush1.xpose.msra.mxu0 %v585
        %672 = vmatprep.subr.mxu0 0.0
        %673 = vmatpush1.xpose.msra.mxu0 %v588
        %674 = vmatprep.subr.mxu0 0.0
        %675 = vmatpush1.xpose.msra.mxu0 %v591
        %676 = vmatprep.subr.mxu0 0.0
        %677 = vmatpush1.xpose.msra.mxu0 %v594
        %678 = vmatprep.subr.mxu0 0.0
        %679 = vmatpush1.xpose.msra.mxu0 %v597
        %680 = vmatprep.subr.mxu0 0.0
        %681 = vmatpush1.xpose.msra.mxu0 %v600
        %682 = vmatprep.subr.mxu0 0.0
        %683 = vmatpush1.xpose.msra.mxu0 %v603
        %684 = vmatprep.subr.mxu0 0.0
        %685 = vmatpush1.xpose.msra.mxu0 %v606
        %686 = vmatprep.subr.mxu0 0.0
        %687 = vmatpush1.xpose.msra.mxu0 %v609
        %688 = vmatprep.subr.mxu0 0.0
        %689 = vmatpush1.xpose.msra.mxu0 %v612
        %690 = vmatprep.subr.mxu0 0.0
        %691 = vmatpush1.xpose.msra.mxu0 %v615
        %692 = vmatprep.subr.mxu0 0.0
        %693 = vmatpush1.xpose.msra.mxu0 %v618
        %694 = vmatprep.subr.mxu0 0.0
        %695 = vmatpush1.xpose.msra.mxu0 %v621
        %696 = vmatprep.subr.mxu0 0.0
        %697 = vmatpush1.xpose.msra.mxu0 %v624
        %698 = vmatprep.subr.mxu0 0.0
        %699 = vmatpush1.xpose.msra.mxu0 %v627
        %700 = vmatprep.subr.mxu0 0.0
        %701 = vmatpush1.xpose.msra.mxu0 %v630
        %702 = vmatprep.subr.mxu0 0.0
        %703 = vmatpush1.xpose.msra.mxu0 %v633
        %704 = vmatprep.subr.mxu0 0.0
        %705 = vmatpush1.xpose.msra.mxu0 %v636
        %706 = vmatprep.subr.mxu0 0.0
        %707 = vmatpush1.xpose.msra.mxu0 %v639
        %708 = vmatprep.subr.mxu0 0.0
        %709 = vmatpush1.xpose.msra.mxu0 %v642
        %710 = vmatprep.subr.mxu0 0.0
        %711 = vmatpush1.xpose.msra.mxu0 %v645
        %712 = vmatprep.subr.mxu0 0.0
        %713 = vmatpush1.xpose.msra.mxu0 %v648
        %714 = vmatprep.mubr.f32.mxu0 0.0
        %715 = vmatmul.mubr.f32.gmra.mrb[0].mxu0 %v552
        %v716 = vpop.f32.mrb[0].mxu0
        %v717 = vadd.f32 0.0, %v716
        %v718 = vpop.f32.mrb[0].mxu0
        %v719 = vadd.f32 0.0, %v718
        %720 = vdwg.mxu0
        %v721 = vrot.slane %v717, 4
        %v722 = vmax.f32 %v717, %v721
        %v723 = vrot.slane %v722, 2
        %v724 = vmax.f32 %v722, %v723
        %v725 = vrot.slane %v724, 1
        %v726 = vmax.f32 %v724, %v725
        %v727 = vrot.slane %v719, 4
        %v728 = vmax.f32 %v719, %v727
        %v729 = vrot.slane %v728, 2
        %v730 = vmax.f32 %v728, %v729
        %v731 = vrot.slane %v730, 1
        %v732 = vmax.f32 %v730, %v731
        %v733 = vsub.f32 %v717, %v726
        %v734 = vsub.f32 %v719, %v732
        %v735 = vmul.f32 %v733, 1.442695
        %v736 = vpow.pop %v735
        %v737 = vmul.f32 %v734, 1.442695
        %v738 = vpow.pop %v737
        %v739 = vrot.slane %v736, 4
        %v740 = vadd.f32 %v736, %v739
        %v741 = vrot.slane %v740, 2
        %v742 = vadd.f32 %v740, %v741
        %v743 = vrot.slane %v742, 1
        %v744 = vadd.f32 %v742, %v743
        %v745 = vrot.slane %v738, 4
        %v746 = vadd.f32 %v738, %v745
        %v747 = vrot.slane %v746, 2
        %v748 = vadd.f32 %v746, %v747
        %v749 = vrot.slane %v748, 1
        %v750 = vadd.f32 %v748, %v749
        %v751 = vrcp.pop %v744
        %v752 = vrcp.pop %v750
        %v753 = vmul.f32 %v744, %v751
        %v754 = vmul.f32 %v750, %v752
        %v755 = vsub.f32 2.0, %v753
        %v756 = vsub.f32 2.0, %v754
        %v757 = vmul.f32 %v751, %v755
        %v758 = vmul.f32 %v752, %v756
        %v759 = vmul.f32 %v736, %v757
        %v760 = vmul.f32 %v738, %v758
        %761 = vxpose.xlu0.b32.start [1/16] %v759, 128
        %762 = vxpose.xlu0.b32.cont [2/16] 0.0, 128
        %763 = vxpose.xlu0.b32.cont [3/16] 0.0, 128
        %764 = vxpose.xlu0.b32.cont [4/16] 0.0, 128
        %765 = vxpose.xlu0.b32.cont [5/16] 0.0, 128
        %766 = vxpose.xlu0.b32.cont [6/16] 0.0, 128
        %767 = vxpose.xlu0.b32.cont [7/16] 0.0, 128
        %768 = vxpose.xlu0.b32.cont [8/16] 0.0, 128
        %769 = vxpose.xlu0.b32.cont [9/16] 0.0, 128
        %770 = vxpose.xlu0.b32.cont [10/16] 0.0, 128
        %771 = vxpose.xlu0.b32.cont [11/16] 0.0, 128
        %772 = vxpose.xlu0.b32.cont [12/16] 0.0, 128
        %773 = vxpose.xlu0.b32.cont [13/16] 0.0, 128
        %774 = vxpose.xlu0.b32.cont [14/16] 0.0, 128
        %775 = vxpose.xlu0.b32.cont [15/16] 0.0, 128
        %776 = vxpose.xlu0.b32.end [16/16] 0.0, 128
        %v777 = vpop.trf.xlu0
        %v778 = vpop.trf.xlu0
        %v779 = vpop.trf.xlu0
        %v780 = vpop.trf.xlu0
        %v781 = vpop.trf.xlu0
        %v782 = vpop.trf.xlu0
        %v783 = vpop.trf.xlu0
        %v784 = vpop.trf.xlu0
        %v785 = vpop.trf.xlu0
        %v786 = vpop.trf.xlu0
        %v787 = vpop.trf.xlu0
        %v788 = vpop.trf.xlu0
        %v789 = vpop.trf.xlu0
        %v790 = vpop.trf.xlu0
        %v791 = vpop.trf.xlu0
        %v792 = vpop.trf.xlu0
        %793 = vxpose.xlu0.b32.start [1/16] %v760, 128
        %794 = vxpose.xlu0.b32.cont [2/16] 0.0, 128
        %795 = vxpose.xlu0.b32.cont [3/16] 0.0, 128
        %796 = vxpose.xlu0.b32.cont [4/16] 0.0, 128
        %797 = vxpose.xlu0.b32.cont [5/16] 0.0, 128
        %798 = vxpose.xlu0.b32.cont [6/16] 0.0, 128
        %799 = vxpose.xlu0.b32.cont [7/16] 0.0, 128
        %800 = vxpose.xlu0.b32.cont [8/16] 0.0, 128
        %801 = vxpose.xlu0.b32.cont [9/16] 0.0, 128
        %802 = vxpose.xlu0.b32.cont [10/16] 0.0, 128
        %803 = vxpose.xlu0.b32.cont [11/16] 0.0, 128
        %804 = vxpose.xlu0.b32.cont [12/16] 0.0, 128
        %805 = vxpose.xlu0.b32.cont [13/16] 0.0, 128
        %806 = vxpose.xlu0.b32.cont [14/16] 0.0, 128
        %807 = vxpose.xlu0.b32.cont [15/16] 0.0, 128
        %808 = vxpose.xlu0.b32.end [16/16] 0.0, 128
        %v809 = vpop.trf.xlu0
        %v810 = vpop.trf.xlu0
        %v811 = vpop.trf.xlu0
        %v812 = vpop.trf.xlu0
        %v813 = vpop.trf.xlu0
        %v814 = vpop.trf.xlu0
        %v815 = vpop.trf.xlu0
        %v816 = vpop.trf.xlu0
        %v817 = vpop.trf.xlu0
        %v818 = vpop.trf.xlu0
        %v819 = vpop.trf.xlu0
        %v820 = vpop.trf.xlu0
        %v821 = vpop.trf.xlu0
        %v822 = vpop.trf.xlu0
        %v823 = vpop.trf.xlu0
        %v824 = vpop.trf.xlu0
        %vm825 = vcmask 64512
        %v827 = vsel %vm825, %v777, 0
        %v830 = vsel %vm825, %v778, 0
        %v833 = vsel %vm825, %v779, 0
        %v836 = vsel %vm825, %v780, 0
        %v839 = vsel %vm825, %v781, 0
        %v842 = vsel %vm825, %v782, 0
        %v845 = vsel %vm825, %v783, 0
        %v848 = vsel %vm825, %v784, 0
        %v851 = vsel %vm825, %v785, 0
        %v854 = vsel %vm825, %v786, 0
        %v857 = vsel %vm825, %v787, 0
        %v860 = vsel %vm825, %v788, 0
        %v863 = vsel %vm825, %v789, 0
        %v866 = vsel %vm825, %v790, 0
        %v869 = vsel %vm825, %v791, 0
        %v872 = vsel %vm825, %v792, 0
        %v875 = vsel %vm825, %v809, 0
        %v878 = vsel %vm825, %v810, 0
        %v881 = vsel %vm825, %v811, 0
        %v884 = vsel %vm825, %v812, 0
        %v887 = vsel %vm825, %v813, 0
        %v890 = vsel %vm825, %v814, 0
        %v893 = vsel %vm825, %v815, 0
        %v896 = vsel %vm825, %v816, 0
        %v899 = vsel %vm825, %v817, 0
        %v902 = vsel %vm825, %v818, 0
        %v905 = vsel %vm825, %v819, 0
        %v908 = vsel %vm825, %v820, 0
        %v911 = vsel %vm825, %v821, 0
        %v914 = vsel %vm825, %v822, 0
        %v917 = vsel %vm825, %v823, 0
        %v920 = vsel %vm825, %v824, 0
        %922 = vmatprep.subr.mxu0 0.0
        %923 = vmatpush1.msra.mxu0 %v295
        %924 = vmatprep.subr.mxu0 0.0
        %925 = vmatpush1.msra.mxu0 0.0
        %926 = vmatprep.subr.mxu0 0.0
        %927 = vmatpush1.msra.mxu0 0.0
        %928 = vmatprep.subr.mxu0 0.0
        %929 = vmatpush1.msra.mxu0 0.0
        %930 = vmatprep.subr.mxu0 0.0
        %931 = vmatpush1.msra.mxu0 0.0
        %932 = vmatprep.subr.mxu0 0.0
        %933 = vmatpush1.msra.mxu0 0.0
        %934 = vmatprep.subr.mxu0 0.0
        %935 = vmatpush1.msra.mxu0 0.0
        %936 = vmatprep.subr.mxu0 0.0
        %937 = vmatpush1.msra.mxu0 0.0
        %938 = vmatprep.subr.mxu0 0.0
        %939 = vmatpush1.msra.mxu0 0.0
        %940 = vmatprep.subr.mxu0 0.0
        %941 = vmatpush1.msra.mxu0 0.0
        %942 = vmatprep.subr.mxu0 0.0
        %943 = vmatpush1.msra.mxu0 0.0
        %944 = vmatprep.subr.mxu0 0.0
        %945 = vmatpush1.msra.mxu0 0.0
        %946 = vmatprep.subr.mxu0 0.0
        %947 = vmatpush1.msra.mxu0 0.0
        %948 = vmatprep.subr.mxu0 0.0
        %949 = vmatpush1.msra.mxu0 0.0
        %950 = vmatprep.subr.mxu0 0.0
        %951 = vmatpush1.msra.mxu0 0.0
        %952 = vmatprep.subr.mxu0 0.0
        %953 = vmatpush1.msra.mxu0 0.0
        %954 = vmatprep.subr.mxu0 0.0
        %955 = vmatpush1.msra.mxu0 0.0
        %956 = vmatprep.subr.mxu0 0.0
        %957 = vmatpush1.msra.mxu0 0.0
        %958 = vmatprep.subr.mxu0 0.0
        %959 = vmatpush1.msra.mxu0 0.0
        %960 = vmatprep.subr.mxu0 0.0
        %961 = vmatpush1.msra.mxu0 0.0
        %962 = vmatprep.subr.mxu0 0.0
        %963 = vmatpush1.msra.mxu0 0.0
        %964 = vmatprep.subr.mxu0 0.0
        %965 = vmatpush1.msra.mxu0 0.0
        %966 = vmatprep.subr.mxu0 0.0
        %967 = vmatpush1.msra.mxu0 0.0
        %968 = vmatprep.subr.mxu0 0.0
        %969 = vmatpush1.msra.mxu0 0.0
        %970 = vmatprep.subr.mxu0 0.0
        %971 = vmatpush1.msra.mxu0 0.0
        %972 = vmatprep.subr.mxu0 0.0
        %973 = vmatpush1.msra.mxu0 0.0
        %974 = vmatprep.subr.mxu0 0.0
        %975 = vmatpush1.msra.mxu0 0.0
        %976 = vmatprep.subr.mxu0 0.0
        %977 = vmatpush1.msra.mxu0 0.0
        %978 = vmatprep.subr.mxu0 0.0
        %979 = vmatpush1.msra.mxu0 0.0
        %980 = vmatprep.subr.mxu0 0.0
        %981 = vmatpush1.msra.mxu0 0.0
        %982 = vmatprep.subr.mxu0 0.0
        %983 = vmatpush1.msra.mxu0 0.0
        %984 = vmatprep.subr.mxu0 0.0
        %985 = vmatpush1.msra.mxu0 0.0
        %986 = vmatprep.mubr.f32.mxu0 0.0
        %987 = vmatmul.mubr.f32.gmra.mrb[0].mxu0 %v827
        %v988 = vpop.f32.mrb[0].mxu0
        %v989 = vadd.f32 0.0, %v988
        %v990 = vpop.f32.mrb[0].mxu0
        %991 = vmatprep.mubr.f32.mxu0 0.0
        %992 = vmatmul.mubr.f32.gmra.mrb[0].mxu0 %v830
        %v993 = vpop.f32.mrb[0].mxu0
        %v994 = vadd.f32 0.0, %v993
        %v995 = vpop.f32.mrb[0].mxu0
        %996 = vmatprep.mubr.f32.mxu0 0.0
        %997 = vmatmul.mubr.f32.gmra.mrb[0].mxu0 %v833
        %v998 = vpop.f32.mrb[0].mxu0
        %v999 = vadd.f32 0.0, %v998
        %v1000 = vpop.f32.mrb[0].mxu0
        %1001 = vmatprep.mubr.f32.mxu0 0.0
        %1002 = vmatmul.mubr.f32.gmra.mrb[0].mxu0 %v836
        %v1003 = vpop.f32.mrb[0].mxu0
        %v1004 = vadd.f32 0.0, %v1003
        %v1005 = vpop.f32.mrb[0].mxu0
        %1006 = vmatprep.mubr.f32.mxu0 0.0
        %1007 = vmatmul.mubr.f32.gmra.mrb[0].mxu0 %v839
        %v1008 = vpop.f32.mrb[0].mxu0
        %v1009 = vadd.f32 0.0, %v1008
        %v1010 = vpop.f32.mrb[0].mxu0
        %1011 = vmatprep.mubr.f32.mxu0 0.0
        %1012 = vmatmul.mubr.f32.gmra.mrb[0].mxu0 %v842
        %v1013 = vpop.f32.mrb[0].mxu0
        %v1014 = vadd.f32 0.0, %v1013
        %v1015 = vpop.f32.mrb[0].mxu0
        %1016 = vmatprep.mubr.f32.mxu0 0.0
        %1017 = vmatmul.mubr.f32.gmra.mrb[0].mxu0 %v845
        %v1018 = vpop.f32.mrb[0].mxu0
        %v1019 = vadd.f32 0.0, %v1018
        %v1020 = vpop.f32.mrb[0].mxu0
        %1021 = vmatprep.mubr.f32.mxu0 0.0
        %1022 = vmatmul.mubr.f32.gmra.mrb[0].mxu0 %v848
        %v1023 = vpop.f32.mrb[0].mxu0
        %v1024 = vadd.f32 0.0, %v1023
        %v1025 = vpop.f32.mrb[0].mxu0
        %1026 = vmatprep.mubr.f32.mxu0 0.0
        %1027 = vmatmul.mubr.f32.gmra.mrb[0].mxu0 %v851
        %v1028 = vpop.f32.mrb[0].mxu0
        %v1029 = vadd.f32 0.0, %v1028
        %v1030 = vpop.f32.mrb[0].mxu0
        %1031 = vmatprep.mubr.f32.mxu0 0.0
        %1032 = vmatmul.mubr.f32.gmra.mrb[0].mxu0 %v854
        %v1033 = vpop.f32.mrb[0].mxu0
        %v1034 = vadd.f32 0.0, %v1033
        %v1035 = vpop.f32.mrb[0].mxu0
        %1036 = vmatprep.mubr.f32.mxu0 0.0
        %1037 = vmatmul.mubr.f32.gmra.mrb[0].mxu0 %v857
        %v1038 = vpop.f32.mrb[0].mxu0
        %v1039 = vadd.f32 0.0, %v1038
        %v1040 = vpop.f32.mrb[0].mxu0
        %1041 = vmatprep.mubr.f32.mxu0 0.0
        %1042 = vmatmul.mubr.f32.gmra.mrb[0].mxu0 %v860
        %v1043 = vpop.f32.mrb[0].mxu0
        %v1044 = vadd.f32 0.0, %v1043
        %v1045 = vpop.f32.mrb[0].mxu0
        %1046 = vmatprep.mubr.f32.mxu0 0.0
        %1047 = vmatmul.mubr.f32.gmra.mrb[0].mxu0 %v863
        %v1048 = vpop.f32.mrb[0].mxu0
        %v1049 = vadd.f32 0.0, %v1048
        %v1050 = vpop.f32.mrb[0].mxu0
        %1051 = vmatprep.mubr.f32.mxu0 0.0
        %1052 = vmatmul.mubr.f32.gmra.mrb[0].mxu0 %v866
        %v1053 = vpop.f32.mrb[0].mxu0
        %v1054 = vadd.f32 0.0, %v1053
        %v1055 = vpop.f32.mrb[0].mxu0
        %1056 = vmatprep.mubr.f32.mxu0 0.0
        %1057 = vmatmul.mubr.f32.gmra.mrb[0].mxu0 %v869
        %v1058 = vpop.f32.mrb[0].mxu0
        %v1059 = vadd.f32 0.0, %v1058
        %v1060 = vpop.f32.mrb[0].mxu0
        %1061 = vmatprep.mubr.f32.mxu0 0.0
        %1062 = vmatmul.mubr.f32.gmra.mrb[0].mxu0 %v872
        %v1063 = vpop.f32.mrb[0].mxu0
        %v1064 = vadd.f32 0.0, %v1063
        %v1065 = vpop.f32.mrb[0].mxu0
        %1066 = vmatprep.mubr.f32.mxu0 0.0
        %1067 = vmatmul.mubr.f32.gmra.mrb[0].mxu0 %v875
        %v1068 = vpop.f32.mrb[0].mxu0
        %v1069 = vadd.f32 0.0, %v1068
        %v1070 = vpop.f32.mrb[0].mxu0
        %1071 = vmatprep.mubr.f32.mxu0 0.0
        %1072 = vmatmul.mubr.f32.gmra.mrb[0].mxu0 %v878
        %v1073 = vpop.f32.mrb[0].mxu0
        %v1074 = vadd.f32 0.0, %v1073
        %v1075 = vpop.f32.mrb[0].mxu0
        %1076 = vmatprep.mubr.f32.mxu0 0.0
        %1077 = vmatmul.mubr.f32.gmra.mrb[0].mxu0 %v881
        %v1078 = vpop.f32.mrb[0].mxu0
        %v1079 = vadd.f32 0.0, %v1078
        %v1080 = vpop.f32.mrb[0].mxu0
        %1081 = vmatprep.mubr.f32.mxu0 0.0
        %1082 = vmatmul.mubr.f32.gmra.mrb[0].mxu0 %v884
        %v1083 = vpop.f32.mrb[0].mxu0
        %v1084 = vadd.f32 0.0, %v1083
        %v1085 = vpop.f32.mrb[0].mxu0
        %1086 = vmatprep.mubr.f32.mxu0 0.0
        %1087 = vmatmul.mubr.f32.gmra.mrb[0].mxu0 %v887
        %v1088 = vpop.f32.mrb[0].mxu0
        %v1089 = vadd.f32 0.0, %v1088
        %v1090 = vpop.f32.mrb[0].mxu0
        %1091 = vmatprep.mubr.f32.mxu0 0.0
        %1092 = vmatmul.mubr.f32.gmra.mrb[0].mxu0 %v890
        %v1093 = vpop.f32.mrb[0].mxu0
        %v1094 = vadd.f32 0.0, %v1093
        %v1095 = vpop.f32.mrb[0].mxu0
        %1096 = vmatprep.mubr.f32.mxu0 0.0
        %1097 = vmatmul.mubr.f32.gmra.mrb[0].mxu0 %v893
        %v1098 = vpop.f32.mrb[0].mxu0
        %v1099 = vadd.f32 0.0, %v1098
        %v1100 = vpop.f32.mrb[0].mxu0
        %1101 = vmatprep.mubr.f32.mxu0 0.0
        %1102 = vmatmul.mubr.f32.gmra.mrb[0].mxu0 %v896
        %v1103 = vpop.f32.mrb[0].mxu0
        %v1104 = vadd.f32 0.0, %v1103
        %v1105 = vpop.f32.mrb[0].mxu0
        %1106 = vmatprep.mubr.f32.mxu0 0.0
        %1107 = vmatmul.mubr.f32.gmra.mrb[0].mxu0 %v899
        %v1108 = vpop.f32.mrb[0].mxu0
        %v1109 = vadd.f32 0.0, %v1108
        %v1110 = vpop.f32.mrb[0].mxu0
        %1111 = vmatprep.mubr.f32.mxu0 0.0
        %1112 = vmatmul.mubr.f32.gmra.mrb[0].mxu0 %v902
        %v1113 = vpop.f32.mrb[0].mxu0
        %v1114 = vadd.f32 0.0, %v1113
        %v1115 = vpop.f32.mrb[0].mxu0
        %1116 = vmatprep.mubr.f32.mxu0 0.0
        %1117 = vmatmul.mubr.f32.gmra.mrb[0].mxu0 %v905
        %v1118 = vpop.f32.mrb[0].mxu0
        %v1119 = vadd.f32 0.0, %v1118
        %v1120 = vpop.f32.mrb[0].mxu0
        %1121 = vmatprep.mubr.f32.mxu0 0.0
        %1122 = vmatmul.mubr.f32.gmra.mrb[0].mxu0 %v908
        %v1123 = vpop.f32.mrb[0].mxu0
        %v1124 = vadd.f32 0.0, %v1123
        %v1125 = vpop.f32.mrb[0].mxu0
        %1126 = vmatprep.mubr.f32.mxu0 0.0
        %1127 = vmatmul.mubr.f32.gmra.mrb[0].mxu0 %v911
        %v1128 = vpop.f32.mrb[0].mxu0
        %v1129 = vadd.f32 0.0, %v1128
        %v1130 = vpop.f32.mrb[0].mxu0
        %1131 = vmatprep.mubr.f32.mxu0 0.0
        %1132 = vmatmul.mubr.f32.gmra.mrb[0].mxu0 %v914
        %v1133 = vpop.f32.mrb[0].mxu0
        %v1134 = vadd.f32 0.0, %v1133
        %v1135 = vpop.f32.mrb[0].mxu0
        %1136 = vmatprep.mubr.f32.mxu0 0.0
        %1137 = vmatmul.mubr.f32.gmra.mrb[0].mxu0 %v917
        %v1138 = vpop.f32.mrb[0].mxu0
        %v1139 = vadd.f32 0.0, %v1138
        %v1140 = vpop.f32.mrb[0].mxu0
        %1141 = vmatprep.mubr.f32.mxu0 0.0
        %1142 = vmatmul.mubr.f32.gmra.mrb[0].mxu0 %v920
        %v1143 = vpop.f32.mrb[0].mxu0
        %v1144 = vadd.f32 0.0, %v1143
        %v1145 = vpop.f32.mrb[0].mxu0
        %1146 = vdwg.mxu0
        %1147 = vst.msk [vmem:[%s292] sm:$0xff] %vm304, %v989
        %1148 = vst.msk [vmem:[%s292 + $0x8] sm:$0xff] %vm304, %v994
        %1149 = vst.msk [vmem:[%s292 + $0x10] sm:$0xff] %vm304, %v999
        %1150 = vst.msk [vmem:[%s292 + $0x18] sm:$0xff] %vm304, %v1004
        %1151 = vst.msk [vmem:[%s292 + $0x20] sm:$0xff] %vm304, %v1009
        %1152 = vst.msk [vmem:[%s292 + $0x28] sm:$0xff] %vm304, %v1014
        %1153 = vst.msk [vmem:[%s292 + $0x30] sm:$0xff] %vm304, %v1019
        %1154 = vst.msk [vmem:[%s292 + $0x38] sm:$0xff] %vm304, %v1024
        %1155 = vst.msk [vmem:[%s292 + $0x40] sm:$0xff] %vm304, %v1029
        %1156 = vst.msk [vmem:[%s292 + $0x48] sm:$0xff] %vm304, %v1034
        %1157 = vst.msk [vmem:[%s292 + $0x50] sm:$0xff] %vm304, %v1039
        %1158 = vst.msk [vmem:[%s292 + $0x58] sm:$0xff] %vm304, %v1044
        %1159 = vst.msk [vmem:[%s292 + $0x60] sm:$0xff] %vm304, %v1049
        %1160 = vst.msk [vmem:[%s292 + $0x68] sm:$0xff] %vm304, %v1054
        %1161 = vst.msk [vmem:[%s292 + $0x70] sm:$0xff] %vm304, %v1059
        %1162 = vst.msk [vmem:[%s292 + $0x78] sm:$0xff] %vm304, %v1064
        %1163 = vst.msk [vmem:[%s292 + $0x80] sm:$0xff] %vm304, %v1069
        %1164 = vst.msk [vmem:[%s292 + $0x88] sm:$0xff] %vm304, %v1074
        %1165 = vst.msk [vmem:[%s292 + $0x90] sm:$0xff] %vm304, %v1079
        %1166 = vst.msk [vmem:[%s292 + $0x98] sm:$0xff] %vm304, %v1084
        %1167 = vst.msk [vmem:[%s292 + $0xa0] sm:$0xff] %vm304, %v1089
        %1168 = vst.msk [vmem:[%s292 + $0xa8] sm:$0xff] %vm304, %v1094
        %1169 = vst.msk [vmem:[%s292 + $0xb0] sm:$0xff] %vm304, %v1099
        %1170 = vst.msk [vmem:[%s292 + $0xb8] sm:$0xff] %vm304, %v1104
        %1171 = vst.msk [vmem:[%s292 + $0xc0] sm:$0xff] %vm304, %v1109
        %1172 = vst.msk [vmem:[%s292 + $0xc8] sm:$0xff] %vm304, %v1114
        %1173 = vst.msk [vmem:[%s292 + $0xd0] sm:$0xff] %vm304, %v1119
        %1174 = vst.msk [vmem:[%s292 + $0xd8] sm:$0xff] %vm304, %v1124
        %1175 = vst.msk [vmem:[%s292 + $0xe0] sm:$0xff] %vm304, %v1129
        %1176 = vst.msk [vmem:[%s292 + $0xe8] sm:$0xff] %vm304, %v1134
        %1177 = vst.msk [vmem:[%s292 + $0xf0] sm:$0xff] %vm304, %v1139
        %1178 = vst.msk [vmem:[%s292 + $0xf8] sm:$0xff] %vm304, %v1144
        %1179 = vst [vmem:[%s269] sm:$0xff] %v759
        %1180 = vst [vmem:[%s269 + $0x8] sm:$0xff] %v760
        %s1181 = smul.u32 32, %s25
        %p1182 = scmp.lt.s32.totalorder %s24, 1
        %s1183 = scalar_select %p1182, %s24, 1
        %p1184 = scmp.lt.s32.totalorder %s1181, 31
        %s1185 = scalar_select %p1184, %s1181, 31
        %s1186 = smul.addr %s1183, 32
        %s1187 = sadd.s32 %s1185, %s1186
        %s1188 = smul.addr %s1187, 8
        %s1189 = scalar_lea.vmem %s4, %s1188
        %s1190 = sand.u32 %s166, 1
        %s1191 = scalar_lea.sflag [#allocation3], %s1190
        %s1192 = sand.u32 %s166, 1
        %s1193 = smul.addr %s1192, 16
        %s1194 = scalar_lea.vmem [#allocation2], %s1193
        // Predicated region
        $region37: #{tpu_custom_call.1} parent=35 // pred_check
          %p1195 = pneg %p148
        $region38: #{tpu_custom_call.1} parent=35 // pred_check_branch
          %1197 = sbr.rel (%p1195) target = $region40
        $region39: #{tpu_custom_call.1} parent=35 // pred_region
          %s1198 = smul.u32 32, %s25
        $region40: #{tpu_custom_call.1} parent=35 // pred_fallthru
          _
        // Predicated region
        $region41: #{tpu_custom_call.1} parent=35 // pred_check
          %p1199 = pneg %p176
        $region42: #{tpu_custom_call.1} parent=35 // pred_check_branch
          %1201 = sbr.rel (%p1199) target = $region44
        $region43: #{tpu_custom_call.1} parent=35 // pred_region
          %s1202 = smul.u32 2, %s25
          %s1204 = ssub.s32 256, 256
          %1205 = vsyncadd %s1191, %s1204
          %s1206 = smul.addr %s24, 2
          %s1207 = sadd.s32 %s1202, %s1206
          %s1208 = smul.addr %s1207, 128
          %s1209 = scalar_lea.hbm %s5, %s1208
          %s1211 = sshll.u32 %s1194, 4
          %s1212 = int_to_ptr.vmem [resolvable:$true] %s1211
          %1214 = dma.vmem_to_hbm [thread:$0]  %s1212, 256, %s1209, %s1191
        $region44: #{tpu_custom_call.1} parent=35 // pred_fallthru
          _
      $region36: #{tpu_custom_call.1} parent=5 // pred_fallthru
        _
      %p1215 = scmp.le.s32.totalorder 2, %s15
      // Predicated region
      $region45: #{tpu_custom_call.1} parent=5 // pred_check
        %p1216 = pneg %p1215
      $region46: #{tpu_custom_call.1} parent=5 // pred_check_branch
        %1218 = sbr.rel (%p1216) target = $region48
      $region47: #{tpu_custom_call.1} parent=5 // pred_region
        %s1219 = ssub.s32 %s15, 2
        // Predicated region
        $region49: #{tpu_custom_call.1} parent=47 // pred_check
          %p1220 = pneg %p154
        $region50: #{tpu_custom_call.1} parent=47 // pred_check_branch
          %1222 = sbr.rel (%p1220) target = $region52
        $region51: #{tpu_custom_call.1} parent=47 // pred_region
          %s1223 = smul.u32 32, %s27
          %p1224 = scmp.lt.s32.totalorder %s26, 1
          %s1225 = scalar_select %p1224, %s26, 1
          %p1226 = scmp.lt.s32.totalorder %s1223, 31
          %s1227 = scalar_select %p1226, %s1223, 31
          %s1228 = smul.addr %s1225, 32
          %s1229 = sadd.s32 %s1227, %s1228
          %s1230 = smul.addr %s1229, 8
          %s1231 = scalar_lea.vmem %s4, %s1230
        $region52: #{tpu_custom_call.1} parent=47 // pred_fallthru
          _
        // Predicated region
        $region53: #{tpu_custom_call.1} parent=47 // pred_check
          %p1232 = pneg %p182
        $region54: #{tpu_custom_call.1} parent=47 // pred_check_branch
          %1234 = sbr.rel (%p1232) target = $region56
        $region55: #{tpu_custom_call.1} parent=47 // pred_region
          %s1235 = sand.u32 %s167, 1
          %s1236 = scalar_lea.sflag [#allocation3], %s1235
          %s1237 = sand.u32 %s167, 1
          %s1238 = smul.addr %s1237, 16
          %s1239 = scalar_lea.vmem [#allocation2], %s1238
          %1240 = dma.done %s1236, 256
        $region56: #{tpu_custom_call.1} parent=47 // pred_fallthru
          _
      $region48: #{tpu_custom_call.1} parent=5 // pred_fallthru
        _
    $region6: #{tpu_custom_call.1} parent=1 // loop_footer
      %s19 = sadd.s32 1, %s15
    $region7: #{tpu_custom_call.1} parent=1 // loop_footer_branch
      %14 = sbr.rel target = $region3
    $region8: #{tpu_custom_call.1} parent=1 // loop_exit
      _
    %1241 = vsyncpa [#allocation3], 1
    %s1242 = scalar_lea.sflag [#allocation3], 1
    %1243 = vsyncpa %s1242, 1

</llo_original>
